<compile_context>
chip_gen: v6e
topology: v6e:2x2x1
jax: 0.10.0
libtpu: 0.0.40
codegen_flags: <defaults>
</compile_context>

<pallas_src>
import functools

import jax
import jax.numpy as jnp
from jax.experimental import pallas as pl
from jax.experimental.pallas import tpu as pltpu


def _round_up(x, m):
    return (x + m - 1) // m * m


# ---------------------------------------------------------------------------
# Pass A: fused-tap conv (single MXU contraction) -> per-image BN partial stats.
# Nothing conv-sized leaves the kernel; only (OC, 1) sums are written.
# ---------------------------------------------------------------------------
def _conv_stats_kernel(x_ref, w_ref, s1_ref, s2_ref, *,
                       taps, Lpad, Wp, OW, n_valid):
    # x_ref:  (Cp, XLENp)   bf16  zero-padded image, spatial dims flattened into lanes
    # w_ref:  (oc_tile, K)  bf16  pre-stacked weights, K = KH*KW*Cp
    # s1_ref, s2_ref: (oc_tile, 1) f32 partial sums for this image / OC tile
    #
    # In-kernel im2col: one lane-shifted (Cp, Lpad) slice per tap, concatenated along
    # the contraction axis.  Concat in f32 (Cp is a multiple of 8 -> every operand is
    # sublane-tile aligned), then cast to bf16 for a single MXU dot.
    rhs = jnp.concatenate(
        [x_ref[:, s:s + Lpad].astype(jnp.float32) for s in taps], axis=0)
    acc = jnp.dot(w_ref[...], rhs.astype(jnp.bfloat16),
                  preferred_element_type=jnp.float32)            # (oc_tile, Lpad)

    # Validity mask built in-kernel (no mask DMA): padded column q maps to
    # (oh, ow) = (q // Wp, q % Wp); only ow < OW and q < OH*Wp are real outputs.
    col = jax.lax.broadcasted_iota(jnp.int32, (1, Lpad), 1)
    valid = ((col % Wp) < OW) & (col < n_valid)
    am = jnp.where(valid, acc, 0.0)
    s1_ref[...] = jnp.sum(am, axis=1, keepdims=True)             # sum(x)
    s2_ref[...] = jnp.sum(am * am, axis=1, keepdims=True)        # sum(x^2)


# ---------------------------------------------------------------------------
# Pass B: recompute the conv, apply folded BN scale/shift + ReLU, lane-dense store.
# ---------------------------------------------------------------------------
def _conv_bn_relu_kernel(x_ref, w_ref, p_ref, o_ref, *, taps, Lpad, with_relu):
    # Recomputing the conv from the bf16 input is cheaper than round-tripping an
    # f32 (OC, L) intermediate through HBM (both passes are HBM-bound).
    rhs = jnp.concatenate(
        [x_ref[:, s:s + Lpad].astype(jnp.float32) for s in taps], axis=0)
    acc = jnp.dot(w_ref[...], rhs.astype(jnp.bfloat16),
                  preferred_element_type=jnp.float32)            # (oc_tile, Lpad)
    sc = p_ref[0]                                                # (oc_tile, 1)
    sh = p_ref[1]
    z = acc * sc + sh
    if with_relu:
        z = jnp.maximum(z, 0.0)
    # Lane-dense store (Lpad is a multiple of 128); the Wp->OW crop happens in XLA.
    o_ref[...] = z.astype(o_ref.dtype)


# ---------------------------------------------------------------------------
# Wrapper
# ---------------------------------------------------------------------------
@functools.partial(jax.jit,
                   static_argnames=("stride", "padding", "dilation", "with_relu"))
def basic_conv(x, weight, bias, gamma, beta, *, stride=1, padding=0, dilation=1,
               with_relu=True):
    """Forward of BasicConv. x: (N, C, H, W) f32, weight: (OC, C, KH, KW).

    `bias` is accepted for API parity with nn.Conv2d but unused: a conv bias
    followed by BatchNorm's batch-mean subtraction cancels exactly (training-mode
    BN forward; if eval-mode running stats were used the bias would have to be
    added back).
    """
    eps = 1e-5
    if stride != 1:
        # TODO(synk): strided conv needs a strided column gather; only stride=1
        # (the default / tested BasicConv configuration) is implemented in Pallas.
        raise NotImplementedError("basic_conv Pallas kernel supports stride=1 only")
    del bias  # cancels against BN batch-mean subtraction (exact identity)

    N, C, H, W = x.shape
    OC, _, KH, KW = weight.shape
    d, p = dilation, padding

    Hp, Wp = H + 2 * p, W + 2 * p
    OH = Hp - (KH - 1) * d
    OW = Wp - (KW - 1) * d

    # Lane-dense geometry: every lane axis the kernels touch is a multiple of 128.
    n_valid = OH * Wp                              # padded-column count of real rows
    Lpad = _round_up(n_valid, 128)
    taps = tuple((kh * Wp + kw) * d for kh in range(KH) for kw in range(KW))
    s_max = max(taps)
    XLENp = _round_up(max(Hp * Wp, Lpad + s_max), 128)

    # Pad channels to a multiple of 8 so tap slices concatenate on aligned sublanes.
    Cp = _round_up(C, 8)
    K = KH * KW * Cp

    # Single bf16 copy of the padded input with spatial dims flattened into lanes
    # (cast before padding so XLA fuses convert+pad into one materialization).
    xp = jnp.pad(x.astype(jnp.bfloat16),
                 ((0, 0), (0, Cp - C), (p, p), (p, p)))
    xflat = jnp.pad(xp.reshape(N, Cp, Hp * Wp),
                    ((0, 0), (0, 0), (0, XLENp - Hp * Wp)))

    # Pre-stacked weights: (OC, KH*KW*Cp), ordered (kh, kw, c) to match the RHS.
    w_stack = jnp.pad(weight, ((0, 0), (0, Cp - C), (0, 0), (0, 0)))
    w_stack = w_stack.transpose(0, 2, 3, 1).reshape(OC, K).astype(jnp.bfloat16)

    # Second "parallel" grid axis over OC tiles (keeps both v7x TensorCores busy
    # when N is small/odd and OC is large); degenerate single tile at small OC.
    if OC <= 128 or OC % 128 != 0:
        oc_tile = OC
    else:
        oc_tile = 128
    n_oc = OC // oc_tile

    cparams = pltpu.CompilerParams(
        dimension_semantics=("parallel", "parallel"),
        # Per-step blocks are tiny here; 32 MiB fits v5e/v6e/v7x scoped-VMEM budgets.
        # TODO(synk): for large images, add an OH tile axis with a (KH-1)*d halo
        # (and an inner L tile to bound the accumulator) and re-derive this limit
        # for v7x's 64 MiB/TC VMEM.
        vmem_limit_bytes=32 * 1024 * 1024,
    )

    # ---- Pass A: per-image BN partial statistics (no conv written to HBM). ----
    kern_a = functools.partial(_conv_stats_kernel, taps=taps, Lpad=Lpad, Wp=Wp,
                               OW=OW, n_valid=n_valid)
    s1, s2 = pl.pallas_call(
        kern_a,
        out_shape=(jax.ShapeDtypeStruct((N, OC, 1), jnp.float32),
                   jax.ShapeDtypeStruct((N, OC, 1), jnp.float32)),
        grid=(N, n_oc),
        in_specs=[
            pl.BlockSpec((None, Cp, XLENp), lambda n, j: (n, 0, 0)),
            pl.BlockSpec((oc_tile, K), lambda n, j: (j, 0)),
        ],
        out_specs=(
            pl.BlockSpec((None, oc_tile, 1), lambda n, j: (n, j, 0)),
            pl.BlockSpec((None, oc_tile, 1), lambda n, j: (n, j, 0)),
        ),
        compiler_params=cparams,
    )(xflat, w_stack)

    # Tiny host-side reduction -> batch statistics -> folded per-channel scale/shift.
    count = N * OH * OW
    tot1 = jnp.sum(s1[:, :, 0], axis=0)
    tot2 = jnp.sum(s2[:, :, 0], axis=0)
    mean = tot1 / count
    var = jnp.maximum(tot2 / count - mean * mean, 0.0)   # biased variance (BN training)
    scale = gamma * jax.lax.rsqrt(var + eps)
    shift = beta - mean * scale
    packed = jnp.stack([scale, shift], axis=0).reshape(2, OC, 1)

    # ---- Pass B: recompute conv, apply scale/shift + ReLU, lane-dense slab out. ----
    kern_b = functools.partial(_conv_bn_relu_kernel, taps=taps, Lpad=Lpad,
                               with_relu=with_relu)
    slab = pl.pallas_call(
        kern_b,
        out_shape=jax.ShapeDtypeStruct((N, OC, Lpad), x.dtype),
        grid=(N, n_oc),
        in_specs=[
            pl.BlockSpec((None, Cp, XLENp), lambda n, j: (n, 0, 0)),
            pl.BlockSpec((oc_tile, K), lambda n, j: (j, 0)),
            pl.BlockSpec((2, oc_tile, 1), lambda n, j: (0, j, 0)),
        ],
        out_specs=pl.BlockSpec((None, oc_tile, Lpad), lambda n, j: (n, j, 0)),
        compiler_params=cparams,
    )(xflat, w_stack, packed)

    # Cheap padded-column -> NCHW crop in XLA (keeps the kernel's store lane-dense).
    out = slab[:, :, :n_valid].reshape(N, OC, OH, Wp)[:, :, :, :OW]
    return out


# ---------------------------------------------------------------------------
# Pure-JAX reference (includes the conv bias -> also validates the cancellation)
# ---------------------------------------------------------------------------
def _reference(x, weight, bias, gamma, beta, *, stride, padding, dilation,
               with_relu, eps=1e-5):
    y = jax.lax.conv_general_dilated(
        x, weight, window_strides=(stride, stride),
        padding=[(padding, padding), (padding, padding)],
        rhs_dilation=(dilation, dilation),
        dimension_numbers=("NCHW", "OIHW", "NCHW"))
    y = y + bias.reshape(1, -1, 1, 1)
    mean = jnp.mean(y, axis=(0, 2, 3), keepdims=True)
    var = jnp.mean((y - mean) ** 2, axis=(0, 2, 3), keepdims=True)
    y = (y - mean) * jax.lax.rsqrt(var + eps)
    y = y * gamma.reshape(1, -1, 1, 1) + beta.reshape(1, -1, 1, 1)
    return jnp.maximum(y, 0.0) if with_relu else y


if __name__ == "__main__":
    # BasicConv(in_planes=4, out_planes=8, kernel_size=3, stride=1, padding=1).
    N, C_IN, C_OUT, HW, KS = 2, 4, 8, 16, 3
    key = jax.random.PRNGKey(0)
    k_x, k_w, k_b, k_g, k_bt = jax.random.split(key, 5)

    x = jax.random.normal(k_x, (N, C_IN, HW, HW), dtype=jnp.float32)
    weight = jax.random.normal(k_w, (C_OUT, C_IN, KS, KS), dtype=jnp.float32) * 0.1
    bias = jax.random.normal(k_b, (C_OUT,), dtype=jnp.float32) * 0.1
    gamma = 1.0 + 0.1 * jax.random.normal(k_g, (C_OUT,), dtype=jnp.float32)
    beta = 0.1 * jax.random.normal(k_bt, (C_OUT,), dtype=jnp.float32)

    out = basic_conv(x, weight, bias, gamma, beta,
                     stride=1, padding=1, dilation=1, with_relu=True)
    out = jax.block_until_ready(out)

    assert out.shape == (N, C_OUT, HW, HW)
    assert bool(jnp.all(out >= 0.0))          # ReLU

    ref = _reference(x, weight, bias, gamma, beta,
                     stride=1, padding=1, dilation=1, with_relu=True)
    max_err = float(jnp.max(jnp.abs(out - ref)))
    # bf16 MXU operands (f32 accumulation): allow a modest tolerance.
    assert max_err < 0.1, f"max abs error vs reference: {max_err}"

    print("KERNEL_OK")
</pallas_src>

<mosaic_0001>
module attributes {stable_mosaic.version = 11 : i64} {
  func.func @_conv_stats_kernel(%arg0: i32, %arg1: i32, %arg2: memref<1x8x512xbf16, #tpu.memory_space<vmem>>, %arg3: memref<8x72xbf16, #tpu.memory_space<vmem>>, %arg4: memref<1x8x1xf32, #tpu.memory_space<vmem>>, %arg5: memref<1x8x1xf32, #tpu.memory_space<vmem>>) attributes {dimension_semantics = [#tpu.dimension_semantics<parallel>, #tpu.dimension_semantics<parallel>], iteration_bounds = array<i64: 2, 1>, scalar_prefetch = 0 : i64, scratch_operands = 0 : i64, tpu.core_type = #tpu.core_type<tc>, window_params = [{transform_indices = @transform_0, window_bounds = array<i64: 1, 8, 512>}, {transform_indices = @transform_1, window_bounds = array<i64: 8, 72>}, {transform_indices = @transform_2, window_bounds = array<i64: 1, 8, 1>}, {transform_indices = @transform_3, window_bounds = array<i64: 1, 8, 1>}]} {
    %c0 = arith.constant 0 : index
    %c0_0 = arith.constant 0 : index
    %c0_1 = arith.constant 0 : index
    %0 = vector.load %arg2[%c0, %c0_0, %c0_1] : memref<1x8x512xbf16, #tpu.memory_space<vmem>>, vector<1x8x384xbf16>
    %1 = vector.shape_cast %0 : vector<1x8x384xbf16> to vector<8x384xbf16>
    %2 = arith.extf %1 : vector<8x384xbf16> to vector<8x384xf32>
    %c0_2 = arith.constant 0 : index
    %c0_3 = arith.constant 0 : index
    %c1 = arith.constant 1 : index
    %3 = vector.load %arg2[%c0_2, %c0_3, %c1] : memref<1x8x512xbf16, #tpu.memory_space<vmem>>, vector<1x8x384xbf16>
    %4 = vector.shape_cast %3 : vector<1x8x384xbf16> to vector<8x384xbf16>
    %5 = arith.extf %4 : vector<8x384xbf16> to vector<8x384xf32>
    %c0_4 = arith.constant 0 : index
    %c0_5 = arith.constant 0 : index
    %c2 = arith.constant 2 : index
    %6 = vector.load %arg2[%c0_4, %c0_5, %c2] : memref<1x8x512xbf16, #tpu.memory_space<vmem>>, vector<1x8x384xbf16>
    %7 = vector.shape_cast %6 : vector<1x8x384xbf16> to vector<8x384xbf16>
    %8 = arith.extf %7 : vector<8x384xbf16> to vector<8x384xf32>
    %c0_6 = arith.constant 0 : index
    %c0_7 = arith.constant 0 : index
    %c18 = arith.constant 18 : index
    %9 = vector.load %arg2[%c0_6, %c0_7, %c18] : memref<1x8x512xbf16, #tpu.memory_space<vmem>>, vector<1x8x384xbf16>
    %10 = vector.shape_cast %9 : vector<1x8x384xbf16> to vector<8x384xbf16>
    %11 = arith.extf %10 : vector<8x384xbf16> to vector<8x384xf32>
    %c0_8 = arith.constant 0 : index
    %c0_9 = arith.constant 0 : index
    %c19 = arith.constant 19 : index
    %12 = vector.load %arg2[%c0_8, %c0_9, %c19] : memref<1x8x512xbf16, #tpu.memory_space<vmem>>, vector<1x8x384xbf16>
    %13 = vector.shape_cast %12 : vector<1x8x384xbf16> to vector<8x384xbf16>
    %14 = arith.extf %13 : vector<8x384xbf16> to vector<8x384xf32>
    %c0_10 = arith.constant 0 : index
    %c0_11 = arith.constant 0 : index
    %c20 = arith.constant 20 : index
    %15 = vector.load %arg2[%c0_10, %c0_11, %c20] : memref<1x8x512xbf16, #tpu.memory_space<vmem>>, vector<1x8x384xbf16>
    %16 = vector.shape_cast %15 : vector<1x8x384xbf16> to vector<8x384xbf16>
    %17 = arith.extf %16 : vector<8x384xbf16> to vector<8x384xf32>
    %c0_12 = arith.constant 0 : index
    %c0_13 = arith.constant 0 : index
    %c36 = arith.constant 36 : index
    %18 = vector.load %arg2[%c0_12, %c0_13, %c36] : memref<1x8x512xbf16, #tpu.memory_space<vmem>>, vector<1x8x384xbf16>
    %19 = vector.shape_cast %18 : vector<1x8x384xbf16> to vector<8x384xbf16>
    %20 = arith.extf %19 : vector<8x384xbf16> to vector<8x384xf32>
    %c0_14 = arith.constant 0 : index
    %c0_15 = arith.constant 0 : index
    %c37 = arith.constant 37 : index
    %21 = vector.load %arg2[%c0_14, %c0_15, %c37] : memref<1x8x512xbf16, #tpu.memory_space<vmem>>, vector<1x8x384xbf16>
    %22 = vector.shape_cast %21 : vector<1x8x384xbf16> to vector<8x384xbf16>
    %23 = arith.extf %22 : vector<8x384xbf16> to vector<8x384xf32>
    %c0_16 = arith.constant 0 : index
    %c0_17 = arith.constant 0 : index
    %c38 = arith.constant 38 : index
    %24 = vector.load %arg2[%c0_16, %c0_17, %c38] : memref<1x8x512xbf16, #tpu.memory_space<vmem>>, vector<1x8x384xbf16>
    %25 = vector.shape_cast %24 : vector<1x8x384xbf16> to vector<8x384xbf16>
    %26 = arith.extf %25 : vector<8x384xbf16> to vector<8x384xf32>
    %27 = tpu.concatenate %2, %5, %8, %11, %14, %17, %20, %23, %26 in 0 : vector<8x384xf32>, vector<8x384xf32>, vector<8x384xf32>, vector<8x384xf32>, vector<8x384xf32>, vector<8x384xf32>, vector<8x384xf32>, vector<8x384xf32>, vector<8x384xf32> -> vector<72x384xf32>
    %c0_18 = arith.constant 0 : index
    %c0_19 = arith.constant 0 : index
    %28 = vector.load %arg3[%c0_18, %c0_19] : memref<8x72xbf16, #tpu.memory_space<vmem>>, vector<8x72xbf16>
    %29 = arith.truncf %27 : vector<72x384xf32> to vector<72x384xbf16>
    %cst = arith.constant dense<0.000000e+00> : vector<8x384xf32>
    %30 = tpu.matmul %28, %29, %cst {dimension_numbers = #tpu.dot_dimension_numbers<[1], [0], [0], [1], [0, 0, 1, 1], [], []>} : vector<8x72xbf16>, vector<72x384xbf16>, vector<8x384xf32> -> vector<8x384xf32>
    %31 = tpu.iota {dimensions = array<i32: 1>} : vector<1x384xi32>
    %c18_i32 = arith.constant 18 : i32
    %c0_i32 = arith.constant 0 : i32
    %32 = arith.cmpi eq, %c18_i32, %c0_i32 : i32
    %c1_i32 = arith.constant 1 : i32
    %33 = arith.select %32, %c1_i32, %c18_i32 : i32
    %34 = vector.broadcast %33 : i32 to vector<1x384xi32>
    %35 = arith.remsi %31, %34 : vector<1x384xi32>
    %c0_i32_20 = arith.constant 0 : i32
    %36 = vector.broadcast %c0_i32_20 : i32 to vector<1x384xi32>
    %37 = arith.cmpi ne, %35, %36 : vector<1x384xi32>
    %c0_i32_21 = arith.constant 0 : i32
    %38 = vector.broadcast %c0_i32_21 : i32 to vector<1x384xi32>
    %39 = arith.cmpi slt, %35, %38 : vector<1x384xi32>
    %c0_i32_22 = arith.constant 0 : i32
    %40 = arith.cmpi slt, %33, %c0_i32_22 : i32
    %41 = vector.broadcast %40 : i1 to vector<1x384xi1>
    %42 = vector.broadcast %41 : vector<1x384xi1> to vector<1x384xi1>
    %43 = arith.xori %39, %42 : vector<1x384xi1>
    %44 = arith.andi %43, %37 : vector<1x384xi1>
    %45 = vector.broadcast %33 : i32 to vector<1x384xi32>
    %46 = arith.addi %35, %45 : vector<1x384xi32>
    %47 = arith.select %44, %46, %35 : vector<1x384xi1>, vector<1x384xi32>
    %c16_i32 = arith.constant 16 : i32
    %48 = vector.broadcast %c16_i32 : i32 to vector<1x384xi32>
    %49 = arith.cmpi slt, %47, %48 : vector<1x384xi32>
    %c288_i32 = arith.constant 288 : i32
    %50 = vector.broadcast %c288_i32 : i32 to vector<1x384xi32>
    %51 = arith.cmpi slt, %31, %50 : vector<1x384xi32>
    %52 = arith.andi %49, %51 : vector<1x384xi1>
    %cst_23 = arith.constant 0.000000e+00 : f32
    %53 = vector.shape_cast %52 : vector<1x384xi1> to vector<1x384xi1>
    %54 = vector.broadcast %53 : vector<1x384xi1> to vector<8x384xi1>
    %55 = vector.broadcast %cst_23 : f32 to vector<8x384xf32>
    %56 = arith.select %54, %30, %55 : vector<8x384xi1>, vector<8x384xf32>
    %cst_24 = arith.constant dense<0.000000e+00> : vector<8xf32>
    %57 = vector.multi_reduction <add>, %56, %cst_24 [1] : vector<8x384xf32> to vector<8xf32>
    %58 = vector.shape_cast %57 : vector<8xf32> to vector<8x1xf32>
    %c0_25 = arith.constant 0 : index
    %c0_26 = arith.constant 0 : index
    %c0_27 = arith.constant 0 : index
    %59 = vector.load %arg4[%c0_25, %c0_26, %c0_27] : memref<1x8x1xf32, #tpu.memory_space<vmem>>, vector<1x8x1xf32>
    %60 = vector.shape_cast %59 : vector<1x8x1xf32> to vector<8x1xf32>
    %61 = vector.shape_cast %58 : vector<8x1xf32> to vector<1x8x1xf32>
    tpu.vector_store %arg4[%c0_25, %c0_26, %c0_27], %61 {strides = array<i32>} : memref<1x8x1xf32, #tpu.memory_space<vmem>>, vector<1x8x1xf32>,
    %62 = arith.mulf %56, %56 : vector<8x384xf32>
    %cst_28 = arith.constant dense<0.000000e+00> : vector<8xf32>
    %63 = vector.multi_reduction <add>, %62, %cst_28 [1] : vector<8x384xf32> to vector<8xf32>
    %64 = vector.shape_cast %63 : vector<8xf32> to vector<8x1xf32>
    %c0_29 = arith.constant 0 : index
    %c0_30 = arith.constant 0 : index
    %c0_31 = arith.constant 0 : index
    %65 = vector.load %arg5[%c0_29, %c0_30, %c0_31] : memref<1x8x1xf32, #tpu.memory_space<vmem>>, vector<1x8x1xf32>
    %66 = vector.shape_cast %65 : vector<1x8x1xf32> to vector<8x1xf32>
    %67 = vector.shape_cast %64 : vector<8x1xf32> to vector<1x8x1xf32>
    tpu.vector_store %arg5[%c0_29, %c0_30, %c0_31], %67 {strides = array<i32>} : memref<1x8x1xf32, #tpu.memory_space<vmem>>, vector<1x8x1xf32>,
    return
  }
  func.func @transform_0(%arg0: i32, %arg1: i32) -> (i32, i32, i32) {
    %c0_i32 = arith.constant 0 : i32
    %c0_i32_0 = arith.constant 0 : i32
    %c0_i32_1 = arith.constant 0 : i32
    return %arg0, %c0_i32, %c0_i32_0 : i32, i32, i32
  }
  func.func @transform_1(%arg0: i32, %arg1: i32) -> (i32, i32) {
    %c0_i32 = arith.constant 0 : i32
    %c0_i32_0 = arith.constant 0 : i32
    return %arg1, %c0_i32 : i32, i32
  }
  func.func @transform_2(%arg0: i32, %arg1: i32) -> (i32, i32, i32) {
    %c0_i32 = arith.constant 0 : i32
    %c0_i32_0 = arith.constant 0 : i32
    return %arg0, %arg1, %c0_i32 : i32, i32, i32
  }
  func.func @transform_3(%arg0: i32, %arg1: i32) -> (i32, i32, i32) {
    %c0_i32 = arith.constant 0 : i32
    %c0_i32_0 = arith.constant 0 : i32
    return %arg0, %arg1, %c0_i32 : i32, i32, i32
  }
}

module attributes {stable_mosaic.version = 11 : i64} {
  func.func @_conv_bn_relu_kernel(%arg0: i32, %arg1: i32, %arg2: memref<1x8x512xbf16, #tpu.memory_space<vmem>>, %arg3: memref<8x72xbf16, #tpu.memory_space<vmem>>, %arg4: memref<2x8x1xf32, #tpu.memory_space<vmem>>, %arg5: memref<1x8x384xf32, #tpu.memory_space<vmem>>) attributes {dimension_semantics = [#tpu.dimension_semantics<parallel>, #tpu.dimension_semantics<parallel>], iteration_bounds = array<i64: 2, 1>, scalar_prefetch = 0 : i64, scratch_operands = 0 : i64, tpu.core_type = #tpu.core_type<tc>, window_params = [{transform_indices = @transform_0, window_bounds = array<i64: 1, 8, 512>}, {transform_indices = @transform_1, window_bounds = array<i64: 8, 72>}, {transform_indices = @transform_2, window_bounds = array<i64: 2, 8, 1>}, {transform_indices = @transform_3, window_bounds = array<i64: 1, 8, 384>}]} {
    %c0 = arith.constant 0 : index
    %c0_0 = arith.constant 0 : index
    %c0_1 = arith.constant 0 : index
    %0 = vector.load %arg2[%c0, %c0_0, %c0_1] : memref<1x8x512xbf16, #tpu.memory_space<vmem>>, vector<1x8x384xbf16>
    %1 = vector.shape_cast %0 : vector<1x8x384xbf16> to vector<8x384xbf16>
    %2 = arith.extf %1 : vector<8x384xbf16> to vector<8x384xf32>
    %c0_2 = arith.constant 0 : index
    %c0_3 = arith.constant 0 : index
    %c1 = arith.constant 1 : index
    %3 = vector.load %arg2[%c0_2, %c0_3, %c1] : memref<1x8x512xbf16, #tpu.memory_space<vmem>>, vector<1x8x384xbf16>
    %4 = vector.shape_cast %3 : vector<1x8x384xbf16> to vector<8x384xbf16>
    %5 = arith.extf %4 : vector<8x384xbf16> to vector<8x384xf32>
    %c0_4 = arith.constant 0 : index
    %c0_5 = arith.constant 0 : index
    %c2 = arith.constant 2 : index
    %6 = vector.load %arg2[%c0_4, %c0_5, %c2] : memref<1x8x512xbf16, #tpu.memory_space<vmem>>, vector<1x8x384xbf16>
    %7 = vector.shape_cast %6 : vector<1x8x384xbf16> to vector<8x384xbf16>
    %8 = arith.extf %7 : vector<8x384xbf16> to vector<8x384xf32>
    %c0_6 = arith.constant 0 : index
    %c0_7 = arith.constant 0 : index
    %c18 = arith.constant 18 : index
    %9 = vector.load %arg2[%c0_6, %c0_7, %c18] : memref<1x8x512xbf16, #tpu.memory_space<vmem>>, vector<1x8x384xbf16>
    %10 = vector.shape_cast %9 : vector<1x8x384xbf16> to vector<8x384xbf16>
    %11 = arith.extf %10 : vector<8x384xbf16> to vector<8x384xf32>
    %c0_8 = arith.constant 0 : index
    %c0_9 = arith.constant 0 : index
    %c19 = arith.constant 19 : index
    %12 = vector.load %arg2[%c0_8, %c0_9, %c19] : memref<1x8x512xbf16, #tpu.memory_space<vmem>>, vector<1x8x384xbf16>
    %13 = vector.shape_cast %12 : vector<1x8x384xbf16> to vector<8x384xbf16>
    %14 = arith.extf %13 : vector<8x384xbf16> to vector<8x384xf32>
    %c0_10 = arith.constant 0 : index
    %c0_11 = arith.constant 0 : index
    %c20 = arith.constant 20 : index
    %15 = vector.load %arg2[%c0_10, %c0_11, %c20] : memref<1x8x512xbf16, #tpu.memory_space<vmem>>, vector<1x8x384xbf16>
    %16 = vector.shape_cast %15 : vector<1x8x384xbf16> to vector<8x384xbf16>
    %17 = arith.extf %16 : vector<8x384xbf16> to vector<8x384xf32>
    %c0_12 = arith.constant 0 : index
    %c0_13 = arith.constant 0 : index
    %c36 = arith.constant 36 : index
    %18 = vector.load %arg2[%c0_12, %c0_13, %c36] : memref<1x8x512xbf16, #tpu.memory_space<vmem>>, vector<1x8x384xbf16>
    %19 = vector.shape_cast %18 : vector<1x8x384xbf16> to vector<8x384xbf16>
    %20 = arith.extf %19 : vector<8x384xbf16> to vector<8x384xf32>
    %c0_14 = arith.constant 0 : index
    %c0_15 = arith.constant 0 : index
    %c37 = arith.constant 37 : index
    %21 = vector.load %arg2[%c0_14, %c0_15, %c37] : memref<1x8x512xbf16, #tpu.memory_space<vmem>>, vector<1x8x384xbf16>
    %22 = vector.shape_cast %21 : vector<1x8x384xbf16> to vector<8x384xbf16>
    %23 = arith.extf %22 : vector<8x384xbf16> to vector<8x384xf32>
    %c0_16 = arith.constant 0 : index
    %c0_17 = arith.constant 0 : index
    %c38 = arith.constant 38 : index
    %24 = vector.load %arg2[%c0_16, %c0_17, %c38] : memref<1x8x512xbf16, #tpu.memory_space<vmem>>, vector<1x8x384xbf16>
    %25 = vector.shape_cast %24 : vector<1x8x384xbf16> to vector<8x384xbf16>
    %26 = arith.extf %25 : vector<8x384xbf16> to vector<8x384xf32>
    %27 = tpu.concatenate %2, %5, %8, %11, %14, %17, %20, %23, %26 in 0 : vector<8x384xf32>, vector<8x384xf32>, vector<8x384xf32>, vector<8x384xf32>, vector<8x384xf32>, vector<8x384xf32>, vector<8x384xf32>, vector<8x384xf32>, vector<8x384xf32> -> vector<72x384xf32>
    %c0_18 = arith.constant 0 : index
    %c0_19 = arith.constant 0 : index
    %28 = vector.load %arg3[%c0_18, %c0_19] : memref<8x72xbf16, #tpu.memory_space<vmem>>, vector<8x72xbf16>
    %29 = arith.truncf %27 : vector<72x384xf32> to vector<72x384xbf16>
    %cst = arith.constant dense<0.000000e+00> : vector<8x384xf32>
    %30 = tpu.matmul %28, %29, %cst {dimension_numbers = #tpu.dot_dimension_numbers<[1], [0], [0], [1], [0, 0, 1, 1], [], []>} : vector<8x72xbf16>, vector<72x384xbf16>, vector<8x384xf32> -> vector<8x384xf32>
    %c0_20 = arith.constant 0 : index
    %c0_21 = arith.constant 0 : index
    %c0_22 = arith.constant 0 : index
    %31 = vector.load %arg4[%c0_20, %c0_21, %c0_22] : memref<2x8x1xf32, #tpu.memory_space<vmem>>, vector<1x8x1xf32>
    %32 = vector.shape_cast %31 : vector<1x8x1xf32> to vector<8x1xf32>
    %c1_23 = arith.constant 1 : index
    %c0_24 = arith.constant 0 : index
    %c0_25 = arith.constant 0 : index
    %33 = vector.load %arg4[%c1_23, %c0_24, %c0_25] : memref<2x8x1xf32, #tpu.memory_space<vmem>>, vector<1x8x1xf32>
    %34 = vector.shape_cast %33 : vector<1x8x1xf32> to vector<8x1xf32>
    %35 = vector.broadcast %32 : vector<8x1xf32> to vector<8x384xf32>
    %36 = arith.mulf %30, %35 : vector<8x384xf32>
    %37 = vector.broadcast %34 : vector<8x1xf32> to vector<8x384xf32>
    %38 = arith.addf %36, %37 : vector<8x384xf32>
    %cst_26 = arith.constant 0.000000e+00 : f32
    %39 = vector.broadcast %cst_26 : f32 to vector<8x384xf32>
    %40 = arith.maximumf %38, %39 : vector<8x384xf32>
    %c0_27 = arith.constant 0 : index
    %c0_28 = arith.constant 0 : index
    %c0_29 = arith.constant 0 : index
    %41 = vector.load %arg5[%c0_27, %c0_28, %c0_29] : memref<1x8x384xf32, #tpu.memory_space<vmem>>, vector<1x8x384xf32>
    %42 = vector.shape_cast %41 : vector<1x8x384xf32> to vector<8x384xf32>
    %43 = vector.shape_cast %40 : vector<8x384xf32> to vector<1x8x384xf32>
    tpu.vector_store %arg5[%c0_27, %c0_28, %c0_29], %43 {strides = array<i32>} : memref<1x8x384xf32, #tpu.memory_space<vmem>>, vector<1x8x384xf32>,
    return
  }
  func.func @transform_0(%arg0: i32, %arg1: i32) -> (i32, i32, i32) {
    %c0_i32 = arith.constant 0 : i32
    %c0_i32_0 = arith.constant 0 : i32
    %c0_i32_1 = arith.constant 0 : i32
    return %arg0, %c0_i32, %c0_i32_0 : i32, i32, i32
  }
  func.func @transform_1(%arg0: i32, %arg1: i32) -> (i32, i32) {
    %c0_i32 = arith.constant 0 : i32
    %c0_i32_0 = arith.constant 0 : i32
    return %arg1, %c0_i32 : i32, i32
  }
  func.func @transform_2(%arg0: i32, %arg1: i32) -> (i32, i32, i32) {
    %c0_i32 = arith.constant 0 : i32
    %c0_i32_0 = arith.constant 0 : i32
    %c0_i32_1 = arith.constant 0 : i32
    return %c0_i32, %arg1, %c0_i32_0 : i32, i32, i32
  }
  func.func @transform_3(%arg0: i32, %arg1: i32) -> (i32, i32, i32) {
    %c0_i32 = arith.constant 0 : i32
    %c0_i32_0 = arith.constant 0 : i32
    return %arg0, %arg1, %c0_i32 : i32, i32, i32
  }
}

</mosaic_0001>

<llo_original>
// kernel: basic_conv.3
$region0: #{basic_conv.3}
  #allocation0 [shape = 'u32[]', space=smem, size = 0x4, offset = 0x4, fixed_abs, tag = 'smem constant byte address 0x4 - core index']
  #allocation1 [shape = 'u32[144,128]{1,0:T(1,128)}', space=vmem, size = 0x12000, scoped, tag = 'internal scratch']
  %s0 = inlined_call_operand.vmem [shape: bf16[2,8,512], index: 0, kind: input, shape index: {}]
  %s1 = inlined_call_operand.vmem [shape: bf16[8,72], index: 1, kind: input, shape index: {}]
  %s2 = inlined_call_operand.vmem [shape: f32[2,8,1], index: 2, kind: input, shape index: {}]
  %s3 = inlined_call_operand.vmem [shape: f32[2,8,384], index: 3, kind: output, shape index: {}]
  %s4 = sld [smem:[#allocation0]]
  $region45: #{basic_conv.3} parent=0
    _
  %s6 = ssub.s32 1, %s4
  %s7 = scalar_select 0, %s6, %s4
  loop: start=0, step=1, limit=4
  $region2: #{basic_conv.3} parent=0 // loop_pre_header
    _
  $region3: #{basic_conv.3} parent=0 // loop_header
    %s9 = sphi 0, %s13
    %p10 = scmp.ge.s32.totalorder %s9, 4
    %s16 = sphi 0, %s28
    %s17 = sphi 0, %s24
    %s18 = sphi 0, %s16
    %s19 = sphi 0, %s17
    %s20 = sphi 0, %s18
    %s21 = sphi 0, %s19
    %s31 = sphi 0, %s33
    %s34 = sphi 0, %s31
    %s35 = sphi 0, %s34
    %s51 = sphi 0, %s35
    %s57 = sphi 0, %s59
    %s60 = sphi 0, %s57
    %s61 = sphi 0, %s60
    %s77 = sphi 0, %s61
    %s83 = sphi 0, %s85
    %s86 = sphi 0, %s83
    %s87 = sphi 0, %s86
    %s103 = sphi 0, %s87
    %s111 = sphi 0, %s113
    %s114 = sphi 0, %s111
    %s115 = sphi 0, %s114
    %s131 = sphi 0, %s115
  $region4: #{basic_conv.3} parent=0 // loop_header_branch
    %12 = sbr.rel (%p10) target = $region8
  $region5: #{basic_conv.3} parent=0 // loop_body
    %s14 = ssub.s32 %s9, 1
    %s15 = ssub.s32 %s9, 2
    %s22 = sadd.s32 1, %s17
    %p23 = scmp.ge.s32.totalorder %s22, 1
    %s24 = scalar_select %p23, 0, %s22
    %s25 = sadd.s32 1, %s16
    %s26 = scalar_select %p23, %s25, %s16
    %p27 = scmp.ge.s32.totalorder %s26, 2
    %s28 = scalar_select %p27, 0, %s26
    %s29 = ssub.s32 %s16, %s28
    %p30 = scmp.eq.s32.totalorder %s29, 0
    %s32 = sadd.s32 %s31, 1
    %s33 = scalar_select %p30, %s31, %s32
    %p36 = pneg %p30
    %p37 = scmp.eq.s32.totalorder %s9, 1
    %p38 = por %p36, %p37
    %p39 = scmp.ne.s32.totalorder %s31, %s34
    %p40 = scmp.eq.s32.totalorder %s9, 0
    %p41 = por %p39, %p40
    %p42 = scmp.ne.s32.totalorder %s31, %s34
    %p43 = scmp.eq.s32.totalorder %s14, 1
    %p44 = por %p42, %p43
    %p45 = scmp.ne.s32.totalorder %s34, %s35
    %p46 = scmp.eq.s32.totalorder %s14, 0
    %p47 = por %p45, %p46
    %p48 = scmp.ne.s32.totalorder %s34, %s35
    %p49 = scmp.eq.s32.totalorder %s15, 1
    %p50 = por %p48, %p49
    %p52 = scmp.ne.s32.totalorder %s35, %s51
    %p53 = scmp.eq.s32.totalorder %s15, 0
    %p54 = por %p52, %p53
    %s55 = ssub.s32 %s17, %s24
    %p56 = scmp.eq.s32.totalorder %s55, 0
    %s58 = sadd.s32 %s57, 1
    %s59 = scalar_select %p56, %s57, %s58
    %p62 = pneg %p56
    %p63 = scmp.eq.s32.totalorder %s9, 1
    %p64 = por %p62, %p63
    %p65 = scmp.ne.s32.totalorder %s57, %s60
    %p66 = scmp.eq.s32.totalorder %s9, 0
    %p67 = por %p65, %p66
    %p68 = scmp.ne.s32.totalorder %s57, %s60
    %p69 = scmp.eq.s32.totalorder %s14, 1
    %p70 = por %p68, %p69
    %p71 = scmp.ne.s32.totalorder %s60, %s61
    %p72 = scmp.eq.s32.totalorder %s14, 0
    %p73 = por %p71, %p72
    %p74 = scmp.ne.s32.totalorder %s60, %s61
    %p75 = scmp.eq.s32.totalorder %s15, 1
    %p76 = por %p74, %p75
    %p78 = scmp.ne.s32.totalorder %s61, %s77
    %p79 = scmp.eq.s32.totalorder %s15, 0
    %p80 = por %p78, %p79
    %s81 = ssub.s32 %s17, %s24
    %p82 = scmp.eq.s32.totalorder %s81, 0
    %s84 = sadd.s32 %s83, 1
    %s85 = scalar_select %p82, %s83, %s84
    %p88 = pneg %p82
    %p89 = scmp.eq.s32.totalorder %s9, 1
    %p90 = por %p88, %p89
    %p91 = scmp.ne.s32.totalorder %s83, %s86
    %p92 = scmp.eq.s32.totalorder %s9, 0
    %p93 = por %p91, %p92
    %p94 = scmp.ne.s32.totalorder %s83, %s86
    %p95 = scmp.eq.s32.totalorder %s14, 1
    %p96 = por %p94, %p95
    %p97 = scmp.ne.s32.totalorder %s86, %s87
    %p98 = scmp.eq.s32.totalorder %s14, 0
    %p99 = por %p97, %p98
    %p100 = scmp.ne.s32.totalorder %s86, %s87
    %p101 = scmp.eq.s32.totalorder %s15, 1
    %p102 = por %p100, %p101
    %p104 = scmp.ne.s32.totalorder %s87, %s103
    %p105 = scmp.eq.s32.totalorder %s15, 0
    %p106 = por %p104, %p105
    %s107 = ssub.s32 %s16, %s28
    %s108 = ssub.s32 %s17, %s24
    %s109 = sor.u32 %s107, %s108
    %p110 = scmp.eq.s32.totalorder %s109, 0
    %s112 = sadd.s32 %s111, 1
    %s113 = scalar_select %p110, %s111, %s112
    %p116 = pneg %p110
    %p117 = scmp.eq.s32.totalorder %s9, 1
    %p118 = por %p116, %p117
    %p119 = scmp.ne.s32.totalorder %s111, %s114
    %p120 = scmp.eq.s32.totalorder %s9, 0
    %p121 = por %p119, %p120
    %p122 = scmp.ne.s32.totalorder %s111, %s114
    %p123 = scmp.eq.s32.totalorder %s14, 1
    %p124 = por %p122, %p123
    %p125 = scmp.ne.s32.totalorder %s114, %s115
    %p126 = scmp.eq.s32.totalorder %s14, 0
    %p127 = por %p125, %p126
    %p128 = scmp.ne.s32.totalorder %s114, %s115
    %p129 = scmp.eq.s32.totalorder %s15, 1
    %p130 = por %p128, %p129
    %p132 = scmp.ne.s32.totalorder %s115, %s131
    %p133 = scmp.eq.s32.totalorder %s15, 0
    %p134 = por %p132, %p133
    %p135 = scmp.le.s32.totalorder 1, %s9
    %p136 = scmp.lt.s32.totalorder %s9, 3
    %p137 = pnand %p135, %p136
    %p138 = pneg %p137
    // Predicated region
    $region9: #{basic_conv.3} parent=5 // pred_check
      _
    $region10: #{basic_conv.3} parent=5 // pred_check_branch
      %140 = sbr.rel (%p137) target = $region12
    $region11: #{basic_conv.3} parent=5 // pred_region
      %s141 = ssub.s32 %s9, 1
      // Predicated region
      $region13: #{basic_conv.3} parent=11 // pred_check
        %p142 = pneg %p73
      $region14: #{basic_conv.3} parent=11 // pred_check_branch
        %144 = sbr.rel (%p142) target = $region16
      $region15: #{basic_conv.3} parent=11 // pred_region
        %p145 = scmp.lt.s32.totalorder %s19, 0
        %s146 = scalar_select %p145, %s19, 0
        %s147 = smul.addr %s146, 4
        %s148 = scalar_lea.vmem %s1, %s147
      $region16: #{basic_conv.3} parent=11 // pred_fallthru
        _
      // Predicated region
      $region17: #{basic_conv.3} parent=11 // pred_check
        %p149 = pneg %p99
      $region18: #{basic_conv.3} parent=11 // pred_check_branch
        %151 = sbr.rel (%p149) target = $region20
      $region19: #{basic_conv.3} parent=11 // pred_region
        %p152 = scmp.lt.s32.totalorder %s19, 0
        %s153 = scalar_select %p152, %s19, 0
        %s154 = smul.addr %s153, 8
        %s155 = scalar_lea.vmem %s2, %s154
      $region20: #{basic_conv.3} parent=11 // pred_fallthru
        _
    $region12: #{basic_conv.3} parent=5 // pred_fallthru
      _
    %p156 = scmp.lt.s32.totalorder %s9, 2
    // Predicated region
    $region21: #{basic_conv.3} parent=5 // pred_check
      %p157 = pneg %p156
    $region22: #{basic_conv.3} parent=5 // pred_check_branch
      %159 = sbr.rel (%p157) target = $region24
    $region23: #{basic_conv.3} parent=5 // pred_region
      // Predicated region
      $region25: #{basic_conv.3} parent=23 // pred_check
        %p160 = pneg %p41
      $region26: #{basic_conv.3} parent=23 // pred_check_branch
        %162 = sbr.rel (%p160) target = $region28
      $region27: #{basic_conv.3} parent=23 // pred_region
        %p163 = scmp.lt.s32.totalorder %s16, 1
        %s164 = scalar_select %p163, %s16, 1
        %s165 = smul.addr %s164, 4
        %s166 = smul.addr %s165, 4
        %s167 = scalar_lea.vmem %s0, %s166
      $region28: #{basic_conv.3} parent=23 // pred_fallthru
        _
    $region24: #{basic_conv.3} parent=5 // pred_fallthru
      _
    %p168 = scmp.le.s32.totalorder 1, %s9
    %p169 = scmp.lt.s32.totalorder %s9, 3
    %p170 = pnand %p168, %p169
    %p171 = pneg %p170
    // Predicated region
    $region29: #{basic_conv.3} parent=5 // pred_check
      _
    $region30: #{basic_conv.3} parent=5 // pred_check_branch
      %173 = sbr.rel (%p170) target = $region32
    $region31: #{basic_conv.3} parent=5 // pred_region
      %s174 = ssub.s32 %s9, 1
      %p175 = scmp.lt.s32.totalorder %s18, 1
      %s176 = scalar_select %p175, %s18, 1
      %s177 = smul.addr %s176, 4
      %s178 = smul.addr %s177, 4
      %s179 = scalar_lea.vmem %s0, %s178
      %p180 = pneg %p47
      %p181 = pneg %p44
      %p182 = scmp.lt.s32.totalorder %s19, 0
      %s183 = scalar_select %p182, %s19, 0
      %s184 = smul.addr %s183, 4
      %s185 = scalar_lea.vmem %s1, %s184
      %p186 = pneg %p73
      %p187 = pneg %p70
      %p188 = scmp.lt.s32.totalorder %s19, 0
      %s189 = scalar_select %p188, %s19, 0
      %s190 = smul.addr %s189, 8
      %s191 = scalar_lea.vmem %s2, %s190
      %p192 = pneg %p99
      %p193 = pneg %p96
      %p194 = pneg %p127
      %p195 = pneg %p124
      %p196 = scmp.lt.s32.totalorder %s18, 1
      %s197 = scalar_select %p196, %s18, 1
      %p198 = scmp.lt.s32.totalorder %s19, 0
      %s199 = scalar_select %p198, %s19, 0
      %s200 = smul.addr %s199, 3
      %s201 = smul.addr %s197, 3
      %s202 = sadd.s32 %s200, %s201
      %s203 = smul.addr %s202, 8
      %s204 = scalar_lea.vmem %s3, %s203
      %p205 = scmp.lt.s32.totalorder %s18, 1
      %s206 = scalar_select %p205, %s18, 1
      %s207 = smul.addr %s206, 4
      %s208 = smul.addr %s207, 4
      %s209 = scalar_lea.vmem %s0, %s208
      %p210 = scmp.lt.s32.totalorder %s19, 0
      %s211 = scalar_select %p210, %s19, 0
      %s212 = smul.addr %s211, 4
      %s213 = scalar_lea.vmem %s1, %s212
      %p214 = scmp.lt.s32.totalorder %s19, 0
      %s215 = scalar_select %p214, %s19, 0
      %s216 = smul.addr %s215, 8
      %s217 = scalar_lea.vmem %s2, %s216
      %p218 = scmp.lt.s32.totalorder %s18, 1
      %s219 = scalar_select %p218, %s18, 1
      %p220 = scmp.lt.s32.totalorder %s19, 0
      %s221 = scalar_select %p220, %s19, 0
      %s222 = smul.addr %s221, 3
      %s223 = smul.addr %s219, 3
      %s224 = sadd.s32 %s222, %s223
      %s225 = smul.addr %s224, 8
      %s226 = scalar_lea.vmem %s3, %s225
      %v228 = vld [vmem:[%s209] sm:$0xff]
      %v229 = vld [vmem:[%s209 + $0x8] sm:$0xf]
      %v230 = vunpack.c.l.bf16 %v228
      %v231 = vunpack.c.h.bf16 %v228
      %v232 = vunpack.c.l.bf16 %v229
      %v233 = vld [vmem:[%s209] sm:$0xff]
      %v234 = vld [vmem:[%s209 + $0x8] sm:$0xff]
      %v235 = vunpack.c.l.bf16 %v233
      %v236 = vunpack.c.h.bf16 %v233
      %v237 = vunpack.c.l.bf16 %v234
      %v238 = vunpack.c.h.bf16 %v234
      %243 = vrot.lane.b32.xlu0 %v235, 127
      %v244 = vpop.permute.xlu0 %243
      %245 = vrot.lane.b32.xlu0 %v236, 127
      %v246 = vpop.permute.xlu0 %245
      %247 = vrot.lane.b32.xlu0 %v237, 127
      %v248 = vpop.permute.xlu0 %247
      %249 = vrot.lane.b32.xlu0 %v238, 127
      %v250 = vpop.permute.xlu0 %249
      %vm251 = vcmask 1039360
      %v252 = vsel %vm251, %v244, %v246
      %v253 = vsel %vm251, %v246, %v248
      %v254 = vsel %vm251, %v248, %v250
      %258 = vrot.lane.b32.xlu0 %v235, 126
      %v259 = vpop.permute.xlu0 %258
      %260 = vrot.lane.b32.xlu0 %v236, 126
      %v261 = vpop.permute.xlu0 %260
      %262 = vrot.lane.b32.xlu0 %v237, 126
      %v263 = vpop.permute.xlu0 %262
      %264 = vrot.lane.b32.xlu0 %v238, 126
      %v265 = vpop.permute.xlu0 %264
      %vm266 = vcmask 1031168
      %v267 = vsel %vm266, %v259, %v261
      %v268 = vsel %vm266, %v261, %v263
      %v269 = vsel %vm266, %v263, %v265
      %273 = vrot.lane.b32.xlu0 %v235, 110
      %v274 = vpop.permute.xlu0 %273
      %275 = vrot.lane.b32.xlu0 %v236, 110
      %v276 = vpop.permute.xlu0 %275
      %277 = vrot.lane.b32.xlu0 %v237, 110
      %v278 = vpop.permute.xlu0 %277
      %279 = vrot.lane.b32.xlu0 %v238, 110
      %v280 = vpop.permute.xlu0 %279
      %vm281 = vcmask 900096
      %v282 = vsel %vm281, %v274, %v276
      %v283 = vsel %vm281, %v276, %v278
      %v284 = vsel %vm281, %v278, %v280
      %288 = vrot.lane.b32.xlu0 %v235, 109
      %v289 = vpop.permute.xlu0 %288
      %290 = vrot.lane.b32.xlu0 %v236, 109
      %v291 = vpop.permute.xlu0 %290
      %292 = vrot.lane.b32.xlu0 %v237, 109
      %v293 = vpop.permute.xlu0 %292
      %294 = vrot.lane.b32.xlu0 %v238, 109
      %v295 = vpop.permute.xlu0 %294
      %vm296 = vcmask 891904
      %v297 = vsel %vm296, %v289, %v291
      %v298 = vsel %vm296, %v291, %v293
      %v299 = vsel %vm296, %v293, %v295
      %303 = vrot.lane.b32.xlu0 %v235, 108
      %v304 = vpop.permute.xlu0 %303
      %305 = vrot.lane.b32.xlu0 %v236, 108
      %v306 = vpop.permute.xlu0 %305
      %307 = vrot.lane.b32.xlu0 %v237, 108
      %v308 = vpop.permute.xlu0 %307
      %309 = vrot.lane.b32.xlu0 %v238, 108
      %v310 = vpop.permute.xlu0 %309
      %vm311 = vcmask 883712
      %v312 = vsel %vm311, %v304, %v306
      %v313 = vsel %vm311, %v306, %v308
      %v314 = vsel %vm311, %v308, %v310
      %318 = vrot.lane.b32.xlu0 %v235, 92
      %v319 = vpop.permute.xlu0 %318
      %320 = vrot.lane.b32.xlu0 %v236, 92
      %v321 = vpop.permute.xlu0 %320
      %322 = vrot.lane.b32.xlu0 %v237, 92
      %v323 = vpop.permute.xlu0 %322
      %324 = vrot.lane.b32.xlu0 %v238, 92
      %v325 = vpop.permute.xlu0 %324
      %vm326 = vcmask 752640
      %v327 = vsel %vm326, %v319, %v321
      %v328 = vsel %vm326, %v321, %v323
      %v329 = vsel %vm326, %v323, %v325
      %333 = vrot.lane.b32.xlu0 %v235, 91
      %v334 = vpop.permute.xlu0 %333
      %335 = vrot.lane.b32.xlu0 %v236, 91
      %v336 = vpop.permute.xlu0 %335
      %337 = vrot.lane.b32.xlu0 %v237, 91
      %v338 = vpop.permute.xlu0 %337
      %339 = vrot.lane.b32.xlu0 %v238, 91
      %v340 = vpop.permute.xlu0 %339
      %vm341 = vcmask 744448
      %v342 = vsel %vm341, %v334, %v336
      %v343 = vsel %vm341, %v336, %v338
      %v344 = vsel %vm341, %v338, %v340
      %348 = vrot.lane.b32.xlu0 %v235, 90
      %v349 = vpop.permute.xlu0 %348
      %350 = vrot.lane.b32.xlu0 %v236, 90
      %v351 = vpop.permute.xlu0 %350
      %352 = vrot.lane.b32.xlu0 %v237, 90
      %v353 = vpop.permute.xlu0 %352
      %354 = vrot.lane.b32.xlu0 %v238, 90
      %v355 = vpop.permute.xlu0 %354
      %vm356 = vcmask 736256
      %v357 = vsel %vm356, %v349, %v351
      %v358 = vsel %vm356, %v351, %v353
      %v359 = vsel %vm356, %v353, %v355
      %v363 = vld [vmem:[%s213] sm:$0xf]
      %v364 = vpack.c.bf16 %v252, %v230
      %v365 = vpack.c.bf16 %v253, %v231
      %v366 = vpack.c.bf16 %v254, %v232
      %v367 = vpack.c.bf16 %v282, %v267
      %v368 = vpack.c.bf16 %v283, %v268
      %v369 = vpack.c.bf16 %v284, %v269
      %v370 = vpack.c.bf16 %v312, %v297
      %v371 = vpack.c.bf16 %v313, %v298
      %v372 = vpack.c.bf16 %v314, %v299
      %v373 = vpack.c.bf16 %v342, %v327
      %v374 = vpack.c.bf16 %v343, %v328
      %v375 = vpack.c.bf16 %v344, %v329
      %v376 = vpack.c.bf16 %v357, %v357
      %v377 = vpack.c.bf16 %v358, %v358
      %v378 = vpack.c.bf16 %v359, %v359
      %vm379 = vcmask 588800
      %v381 = vsel %vm379, %v363, 0
      %vm383 = vcmask 1043456
      %v385 = vsel %vm383, %v376, 0
      %v388 = vsel %vm383, %v377, 0
      %v391 = vsel %vm383, %v378, 0
      %393 = vmatprep.subr.bf16.mxu0 0
      %394 = vmatpush1.bf16.msra.mxu0 0
      %395 = vmatprep.subr.bf16.mxu0 0
      %396 = vmatpush1.bf16.msra.mxu0 0
      %397 = vmatprep.subr.bf16.mxu0 0
      %398 = vmatpush1.bf16.msra.mxu0 0
      %399 = vmatprep.subr.bf16.mxu0 %v388
      %400 = vmatpush1.bf16.msra.mxu0 %v385
      %401 = vmatprep.subr.bf16.mxu0 %v374
      %402 = vmatpush1.bf16.msra.mxu0 %v373
      %403 = vmatprep.subr.bf16.mxu0 %v371
      %404 = vmatpush1.bf16.msra.mxu0 %v370
      %405 = vmatprep.subr.bf16.mxu0 %v368
      %406 = vmatpush1.bf16.msra.mxu0 %v367
      %407 = vmatprep.subr.bf16.mxu0 %v365
      %408 = vmatpush1.bf16.msra.mxu0 %v364
      %409 = vmatprep.subr.bf16.mxu0 0
      %410 = vmatpush2.bf16.msra.mxu0 0
      %411 = vmatprep.subr.bf16.mxu0 0
      %412 = vmatpush2.bf16.msra.mxu0 0
      %413 = vmatprep.subr.bf16.mxu0 0
      %414 = vmatpush2.bf16.msra.mxu0 0
      %415 = vmatprep.subr.bf16.mxu0 0
      %416 = vmatpush2.bf16.msra.mxu0 0
      %417 = vmatprep.subr.bf16.mxu0 0
      %418 = vmatpush2.bf16.msra.mxu0 0
      %419 = vmatprep.subr.bf16.mxu0 0
      %420 = vmatpush2.bf16.msra.mxu0 0
      %421 = vmatprep.subr.bf16.mxu0 0
      %422 = vmatpush2.bf16.msra.mxu0 0
      %423 = vmatprep.subr.bf16.mxu0 0
      %424 = vmatpush2.bf16.msra.mxu0 0
      %425 = vmatprep.mubr.bf16.mxu0 0
      %426 = vmatmul.mubr.bf16.gmra.mxu0 %v381
      %v427 = vpop.f32.mrf.mxu0
      %v428 = vadd.f32 0.0, %v427
      %v429 = vpop.f32.mrf.mxu0
      %v430 = vadd.f32 0.0, %v429
      %v431 = vpop.f32.mrf.mxu0
      %v432 = vpop.f32.mrf.mxu0
      %433 = vdwg.mxu0
      %434 = vmatprep.subr.bf16.mxu0 0
      %435 = vmatpush1.bf16.msra.mxu0 0
      %436 = vmatprep.subr.bf16.mxu0 0
      %437 = vmatpush1.bf16.msra.mxu0 0
      %438 = vmatprep.subr.bf16.mxu0 0
      %439 = vmatpush1.bf16.msra.mxu0 0
      %440 = vmatprep.subr.bf16.mxu0 0
      %441 = vmatpush1.bf16.msra.mxu0 %v391
      %442 = vmatprep.subr.bf16.mxu0 0
      %443 = vmatpush1.bf16.msra.mxu0 %v375
      %444 = vmatprep.subr.bf16.mxu0 0
      %445 = vmatpush1.bf16.msra.mxu0 %v372
      %446 = vmatprep.subr.bf16.mxu0 0
      %447 = vmatpush1.bf16.msra.mxu0 %v369
      %448 = vmatprep.subr.bf16.mxu0 0
      %449 = vmatpush1.bf16.msra.mxu0 %v366
      %450 = vmatprep.subr.bf16.mxu0 0
      %451 = vmatpush2.bf16.msra.mxu0 0
      %452 = vmatprep.subr.bf16.mxu0 0
      %453 = vmatpush2.bf16.msra.mxu0 0
      %454 = vmatprep.subr.bf16.mxu0 0
      %455 = vmatpush2.bf16.msra.mxu0 0
      %456 = vmatprep.subr.bf16.mxu0 0
      %457 = vmatpush2.bf16.msra.mxu0 0
      %458 = vmatprep.subr.bf16.mxu0 0
      %459 = vmatpush2.bf16.msra.mxu0 0
      %460 = vmatprep.subr.bf16.mxu0 0
      %461 = vmatpush2.bf16.msra.mxu0 0
      %462 = vmatprep.subr.bf16.mxu0 0
      %463 = vmatpush2.bf16.msra.mxu0 0
      %464 = vmatprep.subr.bf16.mxu0 0
      %465 = vmatpush2.bf16.msra.mxu0 0
      %466 = vmatprep.mubr.bf16.mxu0 0
      %467 = vmatmul.mubr.bf16.gmra.mxu0 %v381
      %v468 = vpop.f32.mrf.mxu0
      %v469 = vadd.f32 0.0, %v468
      %v470 = vpop.f32.mrf.mxu0
      %v471 = vpop.f32.mrf.mxu0
      %v472 = vpop.f32.mrf.mxu0
      %473 = vdwg.mxu0
      %v474 = vld [vmem:[%s217] sm:$0xff]
      %s475 = scalar_lea.vmem %s217, 8
      %v476 = vld [vmem:[%s475] sm:$0xff]
      %478 = vset.pattern.permute.xlu0 0
      %479 = vperm.xlu0 %478, %v474
      %v480 = vpop.permute.xlu0 %479
      %v482 = vmul.f32 %v428, %v480
      %v483 = vmul.f32 %v430, %v480
      %v484 = vmul.f32 %v469, %v480
      %486 = vset.pattern.permute.xlu0 0
      %487 = vperm.xlu0 %486, %v476
      %v488 = vpop.permute.xlu0 %487
      %v490 = vadd.f32 %v482, %v488
      %v491 = vadd.f32 %v483, %v488
      %v492 = vadd.f32 %v484, %v488
      %v493 = vmax.f32 %v490, 0.0
      %v494 = vmax.f32 %v491, 0.0
      %v495 = vmax.f32 %v492, 0.0
      %496 = vst [vmem:[%s226] sm:$0xff] %v493
      %497 = vst [vmem:[%s226 + $0x8] sm:$0xff] %v494
      %498 = vst [vmem:[%s226 + $0x10] sm:$0xff] %v495
      %p499 = scmp.lt.s32.totalorder %s18, 1
      %s500 = scalar_select %p499, %s18, 1
      %p501 = scmp.lt.s32.totalorder %s19, 0
      %s502 = scalar_select %p501, %s19, 0
      %s503 = smul.addr %s502, 3
      %s504 = smul.addr %s500, 3
      %s505 = sadd.s32 %s503, %s504
      %s506 = smul.addr %s505, 8
      %s507 = scalar_lea.vmem %s3, %s506
      // Predicated region
      $region33: #{basic_conv.3} parent=31 // pred_check
        %p508 = pneg %p124
      $region34: #{basic_conv.3} parent=31 // pred_check_branch
        %510 = sbr.rel (%p508) target = $region36
      $region35: #{basic_conv.3} parent=31 // pred_region
        _
      $region36: #{basic_conv.3} parent=31 // pred_fallthru
        _
    $region32: #{basic_conv.3} parent=5 // pred_fallthru
      _
    %p511 = scmp.le.s32.totalorder 2, %s9
    // Predicated region
    $region37: #{basic_conv.3} parent=5 // pred_check
      %p512 = pneg %p511
    $region38: #{basic_conv.3} parent=5 // pred_check_branch
      %514 = sbr.rel (%p512) target = $region40
    $region39: #{basic_conv.3} parent=5 // pred_region
      %s515 = ssub.s32 %s9, 2
      // Predicated region
      $region41: #{basic_conv.3} parent=39 // pred_check
        %p516 = pneg %p130
      $region42: #{basic_conv.3} parent=39 // pred_check_branch
        %518 = sbr.rel (%p516) target = $region44
      $region43: #{basic_conv.3} parent=39 // pred_region
        %p519 = scmp.lt.s32.totalorder %s20, 1
        %s520 = scalar_select %p519, %s20, 1
        %p521 = scmp.lt.s32.totalorder %s21, 0
        %s522 = scalar_select %p521, %s21, 0
        %s523 = smul.addr %s522, 3
        %s524 = smul.addr %s520, 3
        %s525 = sadd.s32 %s523, %s524
        %s526 = smul.addr %s525, 8
        %s527 = scalar_lea.vmem %s3, %s526
      $region44: #{basic_conv.3} parent=39 // pred_fallthru
        _
    $region40: #{basic_conv.3} parent=5 // pred_fallthru
      _
  $region6: #{basic_conv.3} parent=0 // loop_footer
    %s13 = sadd.s32 1, %s9
  $region7: #{basic_conv.3} parent=0 // loop_footer_branch
    %8 = sbr.rel target = $region3
  $region8: #{basic_conv.3} parent=0 // loop_exit
    _

// kernel: basic_conv.2
$region0: #{basic_conv.2}
  #allocation0 [shape = 'u32[]', space=smem, size = 0x4, offset = 0x4, fixed_abs, tag = 'smem constant byte address 0x4 - core index']
  #allocation1 [shape = 'u32[144,128]{1,0:T(1,128)}', space=vmem, size = 0x12000, scoped, tag = 'internal scratch']
  %s0 = inlined_call_operand.vmem [shape: bf16[2,8,512], index: 0, kind: input, shape index: {}]
  %s1 = inlined_call_operand.vmem [shape: bf16[8,72], index: 1, kind: input, shape index: {}]
  %s2 = inlined_call_operand.vmem [shape: f32[2,8,1], index: 2, kind: output, shape index: {0}]
  %s3 = inlined_call_operand.vmem [shape: f32[2,8,1], index: 3, kind: output, shape index: {1}]
  %4 = xla_tuple %s2, %s3
  %s5 = sld [smem:[#allocation0]]
  $region49: #{basic_conv.2} parent=0
    _
  %s7 = ssub.s32 1, %s5
  %s8 = scalar_select 0, %s7, %s5
  loop: start=0, step=1, limit=4
  $region2: #{basic_conv.2} parent=0 // loop_pre_header
    _
  $region3: #{basic_conv.2} parent=0 // loop_header
    %s10 = sphi 0, %s14
    %p11 = scmp.ge.s32.totalorder %s10, 4
    %s17 = sphi 0, %s29
    %s18 = sphi 0, %s25
    %s19 = sphi 0, %s17
    %s20 = sphi 0, %s18
    %s21 = sphi 0, %s19
    %s22 = sphi 0, %s20
    %s32 = sphi 0, %s34
    %s35 = sphi 0, %s32
    %s36 = sphi 0, %s35
    %s52 = sphi 0, %s36
    %s58 = sphi 0, %s60
    %s61 = sphi 0, %s58
    %s62 = sphi 0, %s61
    %s78 = sphi 0, %s62
    %s86 = sphi 0, %s88
    %s89 = sphi 0, %s86
    %s90 = sphi 0, %s89
    %s106 = sphi 0, %s90
    %s114 = sphi 0, %s116
    %s117 = sphi 0, %s114
    %s118 = sphi 0, %s117
    %s134 = sphi 0, %s118
  $region4: #{basic_conv.2} parent=0 // loop_header_branch
    %13 = sbr.rel (%p11) target = $region8
  $region5: #{basic_conv.2} parent=0 // loop_body
    %s15 = ssub.s32 %s10, 1
    %s16 = ssub.s32 %s10, 2
    %s23 = sadd.s32 1, %s18
    %p24 = scmp.ge.s32.totalorder %s23, 1
    %s25 = scalar_select %p24, 0, %s23
    %s26 = sadd.s32 1, %s17
    %s27 = scalar_select %p24, %s26, %s17
    %p28 = scmp.ge.s32.totalorder %s27, 2
    %s29 = scalar_select %p28, 0, %s27
    %s30 = ssub.s32 %s17, %s29
    %p31 = scmp.eq.s32.totalorder %s30, 0
    %s33 = sadd.s32 %s32, 1
    %s34 = scalar_select %p31, %s32, %s33
    %p37 = pneg %p31
    %p38 = scmp.eq.s32.totalorder %s10, 1
    %p39 = por %p37, %p38
    %p40 = scmp.ne.s32.totalorder %s32, %s35
    %p41 = scmp.eq.s32.totalorder %s10, 0
    %p42 = por %p40, %p41
    %p43 = scmp.ne.s32.totalorder %s32, %s35
    %p44 = scmp.eq.s32.totalorder %s15, 1
    %p45 = por %p43, %p44
    %p46 = scmp.ne.s32.totalorder %s35, %s36
    %p47 = scmp.eq.s32.totalorder %s15, 0
    %p48 = por %p46, %p47
    %p49 = scmp.ne.s32.totalorder %s35, %s36
    %p50 = scmp.eq.s32.totalorder %s16, 1
    %p51 = por %p49, %p50
    %p53 = scmp.ne.s32.totalorder %s36, %s52
    %p54 = scmp.eq.s32.totalorder %s16, 0
    %p55 = por %p53, %p54
    %s56 = ssub.s32 %s18, %s25
    %p57 = scmp.eq.s32.totalorder %s56, 0
    %s59 = sadd.s32 %s58, 1
    %s60 = scalar_select %p57, %s58, %s59
    %p63 = pneg %p57
    %p64 = scmp.eq.s32.totalorder %s10, 1
    %p65 = por %p63, %p64
    %p66 = scmp.ne.s32.totalorder %s58, %s61
    %p67 = scmp.eq.s32.totalorder %s10, 0
    %p68 = por %p66, %p67
    %p69 = scmp.ne.s32.totalorder %s58, %s61
    %p70 = scmp.eq.s32.totalorder %s15, 1
    %p71 = por %p69, %p70
    %p72 = scmp.ne.s32.totalorder %s61, %s62
    %p73 = scmp.eq.s32.totalorder %s15, 0
    %p74 = por %p72, %p73
    %p75 = scmp.ne.s32.totalorder %s61, %s62
    %p76 = scmp.eq.s32.totalorder %s16, 1
    %p77 = por %p75, %p76
    %p79 = scmp.ne.s32.totalorder %s62, %s78
    %p80 = scmp.eq.s32.totalorder %s16, 0
    %p81 = por %p79, %p80
    %s82 = ssub.s32 %s17, %s29
    %s83 = ssub.s32 %s18, %s25
    %s84 = sor.u32 %s82, %s83
    %p85 = scmp.eq.s32.totalorder %s84, 0
    %s87 = sadd.s32 %s86, 1
    %s88 = scalar_select %p85, %s86, %s87
    %p91 = pneg %p85
    %p92 = scmp.eq.s32.totalorder %s10, 1
    %p93 = por %p91, %p92
    %p94 = scmp.ne.s32.totalorder %s86, %s89
    %p95 = scmp.eq.s32.totalorder %s10, 0
    %p96 = por %p94, %p95
    %p97 = scmp.ne.s32.totalorder %s86, %s89
    %p98 = scmp.eq.s32.totalorder %s15, 1
    %p99 = por %p97, %p98
    %p100 = scmp.ne.s32.totalorder %s89, %s90
    %p101 = scmp.eq.s32.totalorder %s15, 0
    %p102 = por %p100, %p101
    %p103 = scmp.ne.s32.totalorder %s89, %s90
    %p104 = scmp.eq.s32.totalorder %s16, 1
    %p105 = por %p103, %p104
    %p107 = scmp.ne.s32.totalorder %s90, %s106
    %p108 = scmp.eq.s32.totalorder %s16, 0
    %p109 = por %p107, %p108
    %s110 = ssub.s32 %s17, %s29
    %s111 = ssub.s32 %s18, %s25
    %s112 = sor.u32 %s110, %s111
    %p113 = scmp.eq.s32.totalorder %s112, 0
    %s115 = sadd.s32 %s114, 1
    %s116 = scalar_select %p113, %s114, %s115
    %p119 = pneg %p113
    %p120 = scmp.eq.s32.totalorder %s10, 1
    %p121 = por %p119, %p120
    %p122 = scmp.ne.s32.totalorder %s114, %s117
    %p123 = scmp.eq.s32.totalorder %s10, 0
    %p124 = por %p122, %p123
    %p125 = scmp.ne.s32.totalorder %s114, %s117
    %p126 = scmp.eq.s32.totalorder %s15, 1
    %p127 = por %p125, %p126
    %p128 = scmp.ne.s32.totalorder %s117, %s118
    %p129 = scmp.eq.s32.totalorder %s15, 0
    %p130 = por %p128, %p129
    %p131 = scmp.ne.s32.totalorder %s117, %s118
    %p132 = scmp.eq.s32.totalorder %s16, 1
    %p133 = por %p131, %p132
    %p135 = scmp.ne.s32.totalorder %s118, %s134
    %p136 = scmp.eq.s32.totalorder %s16, 0
    %p137 = por %p135, %p136
    %p138 = scmp.le.s32.totalorder 1, %s10
    %p139 = scmp.lt.s32.totalorder %s10, 3
    %p140 = pnand %p138, %p139
    %p141 = pneg %p140
    // Predicated region
    $region9: #{basic_conv.2} parent=5 // pred_check
      _
    $region10: #{basic_conv.2} parent=5 // pred_check_branch
      %143 = sbr.rel (%p140) target = $region12
    $region11: #{basic_conv.2} parent=5 // pred_region
      %s144 = ssub.s32 %s10, 1
      // Predicated region
      $region13: #{basic_conv.2} parent=11 // pred_check
        %p145 = pneg %p74
      $region14: #{basic_conv.2} parent=11 // pred_check_branch
        %147 = sbr.rel (%p145) target = $region16
      $region15: #{basic_conv.2} parent=11 // pred_region
        %p148 = scmp.lt.s32.totalorder %s20, 0
        %s149 = scalar_select %p148, %s20, 0
        %s150 = smul.addr %s149, 4
        %s151 = scalar_lea.vmem %s1, %s150
      $region16: #{basic_conv.2} parent=11 // pred_fallthru
        _
    $region12: #{basic_conv.2} parent=5 // pred_fallthru
      _
    %p152 = scmp.lt.s32.totalorder %s10, 2
    // Predicated region
    $region17: #{basic_conv.2} parent=5 // pred_check
      %p153 = pneg %p152
    $region18: #{basic_conv.2} parent=5 // pred_check_branch
      %155 = sbr.rel (%p153) target = $region20
    $region19: #{basic_conv.2} parent=5 // pred_region
      // Predicated region
      $region21: #{basic_conv.2} parent=19 // pred_check
        %p156 = pneg %p42
      $region22: #{basic_conv.2} parent=19 // pred_check_branch
        %158 = sbr.rel (%p156) target = $region24
      $region23: #{basic_conv.2} parent=19 // pred_region
        %p159 = scmp.lt.s32.totalorder %s17, 1
        %s160 = scalar_select %p159, %s17, 1
        %s161 = smul.addr %s160, 4
        %s162 = smul.addr %s161, 4
        %s163 = scalar_lea.vmem %s0, %s162
      $region24: #{basic_conv.2} parent=19 // pred_fallthru
        _
    $region20: #{basic_conv.2} parent=5 // pred_fallthru
      _
    %p164 = scmp.le.s32.totalorder 1, %s10
    %p165 = scmp.lt.s32.totalorder %s10, 3
    %p166 = pnand %p164, %p165
    %p167 = pneg %p166
    // Predicated region
    $region25: #{basic_conv.2} parent=5 // pred_check
      _
    $region26: #{basic_conv.2} parent=5 // pred_check_branch
      %169 = sbr.rel (%p166) target = $region28
    $region27: #{basic_conv.2} parent=5 // pred_region
      %s170 = ssub.s32 %s10, 1
      %p171 = scmp.lt.s32.totalorder %s19, 1
      %s172 = scalar_select %p171, %s19, 1
      %s173 = smul.addr %s172, 4
      %s174 = smul.addr %s173, 4
      %s175 = scalar_lea.vmem %s0, %s174
      %p176 = pneg %p48
      %p177 = pneg %p45
      %p178 = scmp.lt.s32.totalorder %s20, 0
      %s179 = scalar_select %p178, %s20, 0
      %s180 = smul.addr %s179, 4
      %s181 = scalar_lea.vmem %s1, %s180
      %p182 = pneg %p74
      %p183 = pneg %p71
      %p184 = pneg %p102
      %p185 = pneg %p99
      %p186 = scmp.lt.s32.totalorder %s19, 1
      %s187 = scalar_select %p186, %s19, 1
      %p188 = scmp.lt.s32.totalorder %s20, 0
      %s189 = scalar_select %p188, %s20, 0
      %s190 = sadd.s32 %s189, %s187
      %s191 = smul.addr %s190, 8
      %s192 = scalar_lea.vmem %s2, %s191
      %p193 = pneg %p130
      %p194 = pneg %p127
      %p195 = scmp.lt.s32.totalorder %s19, 1
      %s196 = scalar_select %p195, %s19, 1
      %p197 = scmp.lt.s32.totalorder %s20, 0
      %s198 = scalar_select %p197, %s20, 0
      %s199 = sadd.s32 %s198, %s196
      %s200 = smul.addr %s199, 8
      %s201 = scalar_lea.vmem %s3, %s200
      %p202 = scmp.lt.s32.totalorder %s19, 1
      %s203 = scalar_select %p202, %s19, 1
      %s204 = smul.addr %s203, 4
      %s205 = smul.addr %s204, 4
      %s206 = scalar_lea.vmem %s0, %s205
      %p207 = scmp.lt.s32.totalorder %s20, 0
      %s208 = scalar_select %p207, %s20, 0
      %s209 = smul.addr %s208, 4
      %s210 = scalar_lea.vmem %s1, %s209
      %p211 = scmp.lt.s32.totalorder %s19, 1
      %s212 = scalar_select %p211, %s19, 1
      %p213 = scmp.lt.s32.totalorder %s20, 0
      %s214 = scalar_select %p213, %s20, 0
      %s215 = sadd.s32 %s214, %s212
      %s216 = smul.addr %s215, 8
      %s217 = scalar_lea.vmem %s2, %s216
      %p218 = scmp.lt.s32.totalorder %s19, 1
      %s219 = scalar_select %p218, %s19, 1
      %p220 = scmp.lt.s32.totalorder %s20, 0
      %s221 = scalar_select %p220, %s20, 0
      %s222 = sadd.s32 %s221, %s219
      %s223 = smul.addr %s222, 8
      %s224 = scalar_lea.vmem %s3, %s223
      %v226 = vld [vmem:[%s206] sm:$0xff]
      %v227 = vld [vmem:[%s206 + $0x8] sm:$0xf]
      %v228 = vunpack.c.l.bf16 %v226
      %v229 = vunpack.c.h.bf16 %v226
      %v230 = vunpack.c.l.bf16 %v227
      %v231 = vld [vmem:[%s206] sm:$0xff]
      %v232 = vld [vmem:[%s206 + $0x8] sm:$0xff]
      %v233 = vunpack.c.l.bf16 %v231
      %v234 = vunpack.c.h.bf16 %v231
      %v235 = vunpack.c.l.bf16 %v232
      %v236 = vunpack.c.h.bf16 %v232
      %241 = vrot.lane.b32.xlu0 %v233, 127
      %v242 = vpop.permute.xlu0 %241
      %243 = vrot.lane.b32.xlu0 %v234, 127
      %v244 = vpop.permute.xlu0 %243
      %245 = vrot.lane.b32.xlu0 %v235, 127
      %v246 = vpop.permute.xlu0 %245
      %247 = vrot.lane.b32.xlu0 %v236, 127
      %v248 = vpop.permute.xlu0 %247
      %vm249 = vcmask 1039360
      %v250 = vsel %vm249, %v242, %v244
      %v251 = vsel %vm249, %v244, %v246
      %v252 = vsel %vm249, %v246, %v248
      %256 = vrot.lane.b32.xlu0 %v233, 126
      %v257 = vpop.permute.xlu0 %256
      %258 = vrot.lane.b32.xlu0 %v234, 126
      %v259 = vpop.permute.xlu0 %258
      %260 = vrot.lane.b32.xlu0 %v235, 126
      %v261 = vpop.permute.xlu0 %260
      %262 = vrot.lane.b32.xlu0 %v236, 126
      %v263 = vpop.permute.xlu0 %262
      %vm264 = vcmask 1031168
      %v265 = vsel %vm264, %v257, %v259
      %v266 = vsel %vm264, %v259, %v261
      %v267 = vsel %vm264, %v261, %v263
      %271 = vrot.lane.b32.xlu0 %v233, 110
      %v272 = vpop.permute.xlu0 %271
      %273 = vrot.lane.b32.xlu0 %v234, 110
      %v274 = vpop.permute.xlu0 %273
      %275 = vrot.lane.b32.xlu0 %v235, 110
      %v276 = vpop.permute.xlu0 %275
      %277 = vrot.lane.b32.xlu0 %v236, 110
      %v278 = vpop.permute.xlu0 %277
      %vm279 = vcmask 900096
      %v280 = vsel %vm279, %v272, %v274
      %v281 = vsel %vm279, %v274, %v276
      %v282 = vsel %vm279, %v276, %v278
      %286 = vrot.lane.b32.xlu0 %v233, 109
      %v287 = vpop.permute.xlu0 %286
      %288 = vrot.lane.b32.xlu0 %v234, 109
      %v289 = vpop.permute.xlu0 %288
      %290 = vrot.lane.b32.xlu0 %v235, 109
      %v291 = vpop.permute.xlu0 %290
      %292 = vrot.lane.b32.xlu0 %v236, 109
      %v293 = vpop.permute.xlu0 %292
      %vm294 = vcmask 891904
      %v295 = vsel %vm294, %v287, %v289
      %v296 = vsel %vm294, %v289, %v291
      %v297 = vsel %vm294, %v291, %v293
      %301 = vrot.lane.b32.xlu0 %v233, 108
      %v302 = vpop.permute.xlu0 %301
      %303 = vrot.lane.b32.xlu0 %v234, 108
      %v304 = vpop.permute.xlu0 %303
      %305 = vrot.lane.b32.xlu0 %v235, 108
      %v306 = vpop.permute.xlu0 %305
      %307 = vrot.lane.b32.xlu0 %v236, 108
      %v308 = vpop.permute.xlu0 %307
      %vm309 = vcmask 883712
      %v310 = vsel %vm309, %v302, %v304
      %v311 = vsel %vm309, %v304, %v306
      %v312 = vsel %vm309, %v306, %v308
      %316 = vrot.lane.b32.xlu0 %v233, 92
      %v317 = vpop.permute.xlu0 %316
      %318 = vrot.lane.b32.xlu0 %v234, 92
      %v319 = vpop.permute.xlu0 %318
      %320 = vrot.lane.b32.xlu0 %v235, 92
      %v321 = vpop.permute.xlu0 %320
      %322 = vrot.lane.b32.xlu0 %v236, 92
      %v323 = vpop.permute.xlu0 %322
      %vm324 = vcmask 752640
      %v325 = vsel %vm324, %v317, %v319
      %v326 = vsel %vm324, %v319, %v321
      %v327 = vsel %vm324, %v321, %v323
      %331 = vrot.lane.b32.xlu0 %v233, 91
      %v332 = vpop.permute.xlu0 %331
      %333 = vrot.lane.b32.xlu0 %v234, 91
      %v334 = vpop.permute.xlu0 %333
      %335 = vrot.lane.b32.xlu0 %v235, 91
      %v336 = vpop.permute.xlu0 %335
      %337 = vrot.lane.b32.xlu0 %v236, 91
      %v338 = vpop.permute.xlu0 %337
      %vm339 = vcmask 744448
      %v340 = vsel %vm339, %v332, %v334
      %v341 = vsel %vm339, %v334, %v336
      %v342 = vsel %vm339, %v336, %v338
      %346 = vrot.lane.b32.xlu0 %v233, 90
      %v347 = vpop.permute.xlu0 %346
      %348 = vrot.lane.b32.xlu0 %v234, 90
      %v349 = vpop.permute.xlu0 %348
      %350 = vrot.lane.b32.xlu0 %v235, 90
      %v351 = vpop.permute.xlu0 %350
      %352 = vrot.lane.b32.xlu0 %v236, 90
      %v353 = vpop.permute.xlu0 %352
      %vm354 = vcmask 736256
      %v355 = vsel %vm354, %v347, %v349
      %v356 = vsel %vm354, %v349, %v351
      %v357 = vsel %vm354, %v351, %v353
      %v361 = vld [vmem:[%s210] sm:$0xf]
      %v362 = vpack.c.bf16 %v250, %v228
      %v363 = vpack.c.bf16 %v251, %v229
      %v364 = vpack.c.bf16 %v252, %v230
      %v365 = vpack.c.bf16 %v280, %v265
      %v366 = vpack.c.bf16 %v281, %v266
      %v367 = vpack.c.bf16 %v282, %v267
      %v368 = vpack.c.bf16 %v310, %v295
      %v369 = vpack.c.bf16 %v311, %v296
      %v370 = vpack.c.bf16 %v312, %v297
      %v371 = vpack.c.bf16 %v340, %v325
      %v372 = vpack.c.bf16 %v341, %v326
      %v373 = vpack.c.bf16 %v342, %v327
      %v374 = vpack.c.bf16 %v355, %v355
      %v375 = vpack.c.bf16 %v356, %v356
      %v376 = vpack.c.bf16 %v357, %v357
      %vm377 = vcmask 588800
      %v379 = vsel %vm377, %v361, 0
      %vm381 = vcmask 1043456
      %v383 = vsel %vm381, %v374, 0
      %v386 = vsel %vm381, %v375, 0
      %v389 = vsel %vm381, %v376, 0
      %391 = vmatprep.subr.bf16.mxu0 0
      %392 = vmatpush1.bf16.msra.mxu0 0
      %393 = vmatprep.subr.bf16.mxu0 0
      %394 = vmatpush1.bf16.msra.mxu0 0
      %395 = vmatprep.subr.bf16.mxu0 0
      %396 = vmatpush1.bf16.msra.mxu0 0
      %397 = vmatprep.subr.bf16.mxu0 %v386
      %398 = vmatpush1.bf16.msra.mxu0 %v383
      %399 = vmatprep.subr.bf16.mxu0 %v372
      %400 = vmatpush1.bf16.msra.mxu0 %v371
      %401 = vmatprep.subr.bf16.mxu0 %v369
      %402 = vmatpush1.bf16.msra.mxu0 %v368
      %403 = vmatprep.subr.bf16.mxu0 %v366
      %404 = vmatpush1.bf16.msra.mxu0 %v365
      %405 = vmatprep.subr.bf16.mxu0 %v363
      %406 = vmatpush1.bf16.msra.mxu0 %v362
      %407 = vmatprep.subr.bf16.mxu0 0
      %408 = vmatpush2.bf16.msra.mxu0 0
      %409 = vmatprep.subr.bf16.mxu0 0
      %410 = vmatpush2.bf16.msra.mxu0 0
      %411 = vmatprep.subr.bf16.mxu0 0
      %412 = vmatpush2.bf16.msra.mxu0 0
      %413 = vmatprep.subr.bf16.mxu0 0
      %414 = vmatpush2.bf16.msra.mxu0 0
      %415 = vmatprep.subr.bf16.mxu0 0
      %416 = vmatpush2.bf16.msra.mxu0 0
      %417 = vmatprep.subr.bf16.mxu0 0
      %418 = vmatpush2.bf16.msra.mxu0 0
      %419 = vmatprep.subr.bf16.mxu0 0
      %420 = vmatpush2.bf16.msra.mxu0 0
      %421 = vmatprep.subr.bf16.mxu0 0
      %422 = vmatpush2.bf16.msra.mxu0 0
      %423 = vmatprep.mubr.bf16.mxu0 0
      %424 = vmatmul.mubr.bf16.gmra.mxu0 %v379
      %v425 = vpop.f32.mrf.mxu0
      %v426 = vadd.f32 0.0, %v425
      %v427 = vpop.f32.mrf.mxu0
      %v428 = vadd.f32 0.0, %v427
      %v429 = vpop.f32.mrf.mxu0
      %v430 = vpop.f32.mrf.mxu0
      %431 = vdwg.mxu0
      %432 = vmatprep.subr.bf16.mxu0 0
      %433 = vmatpush1.bf16.msra.mxu0 0
      %434 = vmatprep.subr.bf16.mxu0 0
      %435 = vmatpush1.bf16.msra.mxu0 0
      %436 = vmatprep.subr.bf16.mxu0 0
      %437 = vmatpush1.bf16.msra.mxu0 0
      %438 = vmatprep.subr.bf16.mxu0 0
      %439 = vmatpush1.bf16.msra.mxu0 %v389
      %440 = vmatprep.subr.bf16.mxu0 0
      %441 = vmatpush1.bf16.msra.mxu0 %v373
      %442 = vmatprep.subr.bf16.mxu0 0
      %443 = vmatpush1.bf16.msra.mxu0 %v370
      %444 = vmatprep.subr.bf16.mxu0 0
      %445 = vmatpush1.bf16.msra.mxu0 %v367
      %446 = vmatprep.subr.bf16.mxu0 0
      %447 = vmatpush1.bf16.msra.mxu0 %v364
      %448 = vmatprep.subr.bf16.mxu0 0
      %449 = vmatpush2.bf16.msra.mxu0 0
      %450 = vmatprep.subr.bf16.mxu0 0
      %451 = vmatpush2.bf16.msra.mxu0 0
      %452 = vmatprep.subr.bf16.mxu0 0
      %453 = vmatpush2.bf16.msra.mxu0 0
      %454 = vmatprep.subr.bf16.mxu0 0
      %455 = vmatpush2.bf16.msra.mxu0 0
      %456 = vmatprep.subr.bf16.mxu0 0
      %457 = vmatpush2.bf16.msra.mxu0 0
      %458 = vmatprep.subr.bf16.mxu0 0
      %459 = vmatpush2.bf16.msra.mxu0 0
      %460 = vmatprep.subr.bf16.mxu0 0
      %461 = vmatpush2.bf16.msra.mxu0 0
      %462 = vmatprep.subr.bf16.mxu0 0
      %463 = vmatpush2.bf16.msra.mxu0 0
      %464 = vmatprep.mubr.bf16.mxu0 0
      %465 = vmatmul.mubr.bf16.gmra.mxu0 %v379
      %v466 = vpop.f32.mrf.mxu0
      %v467 = vadd.f32 0.0, %v466
      %v468 = vpop.f32.mrf.mxu0
      %v469 = vpop.f32.mrf.mxu0
      %v470 = vpop.f32.mrf.mxu0
      %471 = vdwg.mxu0
      %v472 = vlaneseq
      %v473 = vand.u32 %v472, 127
      %v474 = vadd.s32 %v473, 128
      %v475 = vadd.s32 %v473, 256
      %vm476 = vcmp.lt.s32.totalorder %v473, 0
      %v477 = vsub.s32 0, %v473
      %v478 = vsel %vm476, %v477, %v473
      %v479 = vmul.u32.u64.compose %v478, 3817748708
      %v480 = vextract.low.u32 %v479
      %v481 = vextract.high.u32 %v479
      %v482 = vshrl.u32 %v481, 4
      %v483 = vmul.u32 %v482, 18
      %v484 = vsub.s32 %v478, %v483
      %v485 = vsub.s32 0, %v484
      %v486 = vsel %vm476, %v485, %v484
      %vm487 = vcmp.lt.s32.totalorder %v474, 0
      %v488 = vsub.s32 0, %v474
      %v489 = vsel %vm487, %v488, %v474
      %v490 = vmul.u32.u64.compose %v489, 3817748708
      %v491 = vextract.low.u32 %v490
      %v492 = vextract.high.u32 %v490
      %v493 = vshrl.u32 %v492, 4
      %v494 = vmul.u32 %v493, 18
      %v495 = vsub.s32 %v489, %v494
      %v496 = vsub.s32 0, %v495
      %v497 = vsel %vm487, %v496, %v495
      %vm498 = vcmp.lt.s32.totalorder %v475, 0
      %v499 = vsub.s32 0, %v475
      %v500 = vsel %vm498, %v499, %v475
      %v501 = vmul.u32.u64.compose %v500, 3817748708
      %v502 = vextract.low.u32 %v501
      %v503 = vextract.high.u32 %v501
      %v504 = vshrl.u32 %v503, 4
      %v505 = vmul.u32 %v504, 18
      %v506 = vsub.s32 %v500, %v505
      %v507 = vsub.s32 0, %v506
      %v508 = vsel %vm498, %v507, %v506
      %vm509 = vcmp.ne.s32.totalorder %v486, 0
      %vm510 = vcmp.ne.s32.totalorder %v497, 0
      %vm511 = vcmp.ne.s32.totalorder %v508, 0
      %vm512 = vcmp.lt.s32.totalorder %v486, 0
      %vm513 = vcmp.lt.s32.totalorder %v497, 0
      %vm514 = vcmp.lt.s32.totalorder %v508, 0
      %vm515 = vmand %vm512, %vm509
      %vm516 = vmand %vm513, %vm510
      %vm517 = vmand %vm514, %vm511
      %v518 = vadd.s32 %v486, 18
      %v519 = vadd.s32 %v497, 18
      %v520 = vadd.s32 %v508, 18
      %v521 = vsel %vm515, %v518, %v486
      %v522 = vsel %vm516, %v519, %v497
      %v523 = vsel %vm517, %v520, %v508
      %vm524 = vcmp.lt.s32.totalorder %v521, 16
      %vm525 = vcmp.lt.s32.totalorder %v522, 16
      %vm526 = vcmp.lt.s32.totalorder %v523, 16
      %vm527 = vcmp.lt.s32.totalorder %v473, 288
      %vm528 = vcmp.lt.s32.totalorder %v474, 288
      %vm529 = vcmp.lt.s32.totalorder %v475, 288
      %vm530 = vmand %vm524, %vm527
      %vm531 = vmand %vm525, %vm528
      %vm532 = vmand %vm526, %vm529
      %v533 = vsel %vm530, 1, 0
      %v534 = vsel %vm531, 1, 0
      %v535 = vsel %vm532, 1, 0
      %vm536 = vcmp.eq.s32.totalorder %v533, 1
      %vm537 = vcmp.eq.s32.totalorder %v534, 1
      %vm538 = vcmp.eq.s32.totalorder %v535, 1
      %v539 = vsel %vm536, %v426, 0.0
      %v540 = vsel %vm537, %v428, 0.0
      %v541 = vsel %vm538, %v467, 0.0
      %v542 = vadd.f32 %v539, %v540
      %v543 = vadd.f32 %v542, %v541
      %544 = vadd.xlane.f32.xlu0 %v543
      %v545 = vpop.xlane.xlu0 %544
      %vm546 = vcmask 7168
      %547 = vst.msk [vmem:[%s217] sm:$0xff] %vm546, %v545
      %v548 = vmul.f32 %v539, %v539
      %v549 = vmul.f32 %v540, %v540
      %v550 = vmul.f32 %v541, %v541
      %v551 = vadd.f32 %v548, %v549
      %v552 = vadd.f32 %v551, %v550
      %553 = vadd.xlane.f32.xlu0 %v552
      %v554 = vpop.xlane.xlu0 %553
      %555 = vst.msk [vmem:[%s224] sm:$0xff] %vm546, %v554
      %p556 = scmp.lt.s32.totalorder %s19, 1
      %s557 = scalar_select %p556, %s19, 1
      %p558 = scmp.lt.s32.totalorder %s20, 0
      %s559 = scalar_select %p558, %s20, 0
      %s560 = sadd.s32 %s559, %s557
      %s561 = smul.addr %s560, 8
      %s562 = scalar_lea.vmem %s2, %s561
      %p563 = scmp.lt.s32.totalorder %s19, 1
      %s564 = scalar_select %p563, %s19, 1
      %p565 = scmp.lt.s32.totalorder %s20, 0
      %s566 = scalar_select %p565, %s20, 0
      %s567 = sadd.s32 %s566, %s564
      %s568 = smul.addr %s567, 8
      %s569 = scalar_lea.vmem %s3, %s568
      // Predicated region
      $region29: #{basic_conv.2} parent=27 // pred_check
        %p570 = pneg %p99
      $region30: #{basic_conv.2} parent=27 // pred_check_branch
        %572 = sbr.rel (%p570) target = $region32
      $region31: #{basic_conv.2} parent=27 // pred_region
        _
      $region32: #{basic_conv.2} parent=27 // pred_fallthru
        _
      // Predicated region
      $region33: #{basic_conv.2} parent=27 // pred_check
        %p573 = pneg %p127
      $region34: #{basic_conv.2} parent=27 // pred_check_branch
        %575 = sbr.rel (%p573) target = $region36
      $region35: #{basic_conv.2} parent=27 // pred_region
        _
      $region36: #{basic_conv.2} parent=27 // pred_fallthru
        _
    $region28: #{basic_conv.2} parent=5 // pred_fallthru
      _
    %p576 = scmp.le.s32.totalorder 2, %s10
    // Predicated region
    $region37: #{basic_conv.2} parent=5 // pred_check
      %p577 = pneg %p576
    $region38: #{basic_conv.2} parent=5 // pred_check_branch
      %579 = sbr.rel (%p577) target = $region40
    $region39: #{basic_conv.2} parent=5 // pred_region
      %s580 = ssub.s32 %s10, 2
      // Predicated region
      $region41: #{basic_conv.2} parent=39 // pred_check
        %p581 = pneg %p105
      $region42: #{basic_conv.2} parent=39 // pred_check_branch
        %583 = sbr.rel (%p581) target = $region44
      $region43: #{basic_conv.2} parent=39 // pred_region
        %p584 = scmp.lt.s32.totalorder %s21, 1
        %s585 = scalar_select %p584, %s21, 1
        %p586 = scmp.lt.s32.totalorder %s22, 0
        %s587 = scalar_select %p586, %s22, 0
        %s588 = sadd.s32 %s587, %s585
        %s589 = smul.addr %s588, 8
        %s590 = scalar_lea.vmem %s2, %s589
      $region44: #{basic_conv.2} parent=39 // pred_fallthru
        _
      // Predicated region
      $region45: #{basic_conv.2} parent=39 // pred_check
        %p591 = pneg %p133
      $region46: #{basic_conv.2} parent=39 // pred_check_branch
        %593 = sbr.rel (%p591) target = $region48
      $region47: #{basic_conv.2} parent=39 // pred_region
        %p594 = scmp.lt.s32.totalorder %s21, 1
        %s595 = scalar_select %p594, %s21, 1
        %p596 = scmp.lt.s32.totalorder %s22, 0
        %s597 = scalar_select %p596, %s22, 0
        %s598 = sadd.s32 %s597, %s595
        %s599 = smul.addr %s598, 8
        %s600 = scalar_lea.vmem %s3, %s599
      $region48: #{basic_conv.2} parent=39 // pred_fallthru
        _
    $region40: #{basic_conv.2} parent=5 // pred_fallthru
      _
  $region6: #{basic_conv.2} parent=0 // loop_footer
    %s14 = sadd.s32 1, %s10
  $region7: #{basic_conv.2} parent=0 // loop_footer_branch
    %9 = sbr.rel target = $region3
  $region8: #{basic_conv.2} parent=0 // loop_exit
    _

</llo_original>
